<compile_context>
chip_gen: v6e
topology: v6e:2x2x1
jax: 0.10.0
libtpu: 0.0.40
codegen_flags: <defaults>
</compile_context>

<pallas_src>
import math

import jax
import jax.numpy as jnp
from jax.experimental import pallas as pl
from jax.experimental.pallas import tpu as pltpu


def _identity_copy_kernel(r_ref, i_ref, out_r_ref, out_i_ref):
    # Pure identity: copy both VMEM tiles through.
    out_r_ref[...] = r_ref[...]
    out_i_ref[...] = i_ref[...]


def _choose_layout(total: int):
    """Pick (rows, lane_width, block_rows) for a lane-dense 2-D slab.

    Prefers a wide, 128-multiple lane dimension; caps tiles around
    512*1024 f32 elements (~2 MiB) so 2 in + 2 out double-buffered blocks
    stay well under the default scoped VMEM limit on v5e/v6e/v7x.
    """
    for lane in (1024, 512, 256, 128):
        if total % lane == 0:
            rows = total // lane
            max_block_rows = max(8, (512 * 1024) // lane)
            if rows <= max_block_rows:
                block_rows = rows  # full extent in that dim -> always legal
            else:
                block_rows = (max_block_rows // 8) * 8  # multiple of 8
            return rows, lane, block_rows
    # Fallback for totals not divisible by 128: single full-extent block.
    return 1, total, 1


class ComplexIdentityBN:
    """Fake BN that just returns (r, i); `num_features` kept for parity."""

    def __init__(self, num_features: int) -> None:
        # No learnable parameters in the reference module.
        self.n = num_features

    def __call__(self, input_real: jax.Array, input_imag: jax.Array):
        assert input_real.shape == input_imag.shape
        assert input_real.dtype == input_imag.dtype
        orig_shape = input_real.shape
        total = math.prod(orig_shape) if orig_shape else 1

        rows, lane, block_rows = _choose_layout(total)
        r2 = input_real.reshape(rows, lane)
        i2 = input_imag.reshape(rows, lane)

        grid = (pl.cdiv(rows, block_rows),)
        spec = pl.BlockSpec((block_rows, lane), lambda g: (g, 0))
        out_sds = jax.ShapeDtypeStruct((rows, lane), r2.dtype)

        itemsize = jnp.dtype(r2.dtype).itemsize
        cost = pl.CostEstimate(
            flops=0,
            transcendentals=0,
            bytes_accessed=4 * total * itemsize,  # 2 reads + 2 writes
        )

        out_r, out_i = pl.pallas_call(
            _identity_copy_kernel,
            grid=grid,
            in_specs=[spec, spec],
            out_specs=(spec, spec),
            out_shape=(out_sds, out_sds),
            input_output_aliases={0: 0, 1: 1},
            compiler_params=pltpu.CompilerParams(
                dimension_semantics=("parallel",),
            ),
            cost_estimate=cost,
        )(r2, i2)

        return out_r.reshape(orig_shape), out_i.reshape(orig_shape)


if __name__ == "__main__":
    key = jax.random.PRNGKey(0)
    k_r, k_i, k_r2, k_i2 = jax.random.split(key, 4)

    bn = ComplexIdentityBN(num_features=4)

    # NCHW inputs consistent with a conv/BN-style module: batch=2, channels=4,
    # spatial=16x16 (total = 2048 -> lane-dense (2, 1024) slab).
    x_real = jax.random.normal(k_r, (2, 4, 16, 16), dtype=jnp.float32)
    x_imag = jax.random.normal(k_i, (2, 4, 16, 16), dtype=jnp.float32)
    out_real, out_imag = bn(x_real, x_imag)
    jax.block_until_ready((out_real, out_imag))

    assert out_real.shape == x_real.shape and out_imag.shape == x_imag.shape
    assert out_real.dtype == x_real.dtype and out_imag.dtype == x_imag.dtype
    assert jnp.array_equal(out_real, x_real)
    assert jnp.array_equal(out_imag, x_imag)

    # Ragged total (210 elements, not a multiple of 128) exercises the
    # full-extent fallback block path.
    y_real = jax.random.normal(k_r2, (2, 3, 5, 7), dtype=jnp.float32)
    y_imag = jax.random.normal(k_i2, (2, 3, 5, 7), dtype=jnp.float32)
    oy_real, oy_imag = bn(y_real, y_imag)
    jax.block_until_ready((oy_real, oy_imag))

    assert jnp.array_equal(oy_real, y_real)
    assert jnp.array_equal(oy_imag, y_imag)

    print("KERNEL_OK")
</pallas_src>

<mosaic_0001>
module attributes {stable_mosaic.version = 11 : i64} {
  func.func @_identity_copy_kernel(%arg0: i32, %arg1: memref<2x1024xf32, #tpu.memory_space<vmem>>, %arg2: memref<2x1024xf32, #tpu.memory_space<vmem>>, %arg3: memref<2x1024xf32, #tpu.memory_space<vmem>>, %arg4: memref<2x1024xf32, #tpu.memory_space<vmem>>) attributes {dimension_semantics = [#tpu.dimension_semantics<parallel>], iteration_bounds = array<i64: 1>, scalar_prefetch = 0 : i64, scratch_operands = 0 : i64, tpu.core_type = #tpu.core_type<tc>, window_params = [{transform_indices = @transform_0, window_bounds = array<i64: 2, 1024>}, {transform_indices = @transform_1, window_bounds = array<i64: 2, 1024>}, {transform_indices = @transform_2, window_bounds = array<i64: 2, 1024>}, {transform_indices = @transform_3, window_bounds = array<i64: 2, 1024>}]} {
    %c0 = arith.constant 0 : index
    %c0_0 = arith.constant 0 : index
    %0 = vector.load %arg1[%c0, %c0_0] : memref<2x1024xf32, #tpu.memory_space<vmem>>, vector<2x1024xf32>
    %c0_1 = arith.constant 0 : index
    %c0_2 = arith.constant 0 : index
    %1 = vector.load %arg3[%c0_1, %c0_2] : memref<2x1024xf32, #tpu.memory_space<vmem>>, vector<2x1024xf32>
    tpu.vector_store %arg3[%c0_1, %c0_2], %0 {strides = array<i32>} : memref<2x1024xf32, #tpu.memory_space<vmem>>, vector<2x1024xf32>,
    %c0_3 = arith.constant 0 : index
    %c0_4 = arith.constant 0 : index
    %2 = vector.load %arg2[%c0_3, %c0_4] : memref<2x1024xf32, #tpu.memory_space<vmem>>, vector<2x1024xf32>
    %c0_5 = arith.constant 0 : index
    %c0_6 = arith.constant 0 : index
    %3 = vector.load %arg4[%c0_5, %c0_6] : memref<2x1024xf32, #tpu.memory_space<vmem>>, vector<2x1024xf32>
    tpu.vector_store %arg4[%c0_5, %c0_6], %2 {strides = array<i32>} : memref<2x1024xf32, #tpu.memory_space<vmem>>, vector<2x1024xf32>,
    return
  }
  func.func @transform_0(%arg0: i32) -> (i32, i32) {
    %c0_i32 = arith.constant 0 : i32
    %c0_i32_0 = arith.constant 0 : i32
    return %arg0, %c0_i32 : i32, i32
  }
  func.func @transform_1(%arg0: i32) -> (i32, i32) {
    %c0_i32 = arith.constant 0 : i32
    %c0_i32_0 = arith.constant 0 : i32
    return %arg0, %c0_i32 : i32, i32
  }
  func.func @transform_2(%arg0: i32) -> (i32, i32) {
    %c0_i32 = arith.constant 0 : i32
    %c0_i32_0 = arith.constant 0 : i32
    return %arg0, %c0_i32 : i32, i32
  }
  func.func @transform_3(%arg0: i32) -> (i32, i32) {
    %c0_i32 = arith.constant 0 : i32
    %c0_i32_0 = arith.constant 0 : i32
    return %arg0, %c0_i32 : i32, i32
  }
}

</mosaic_0001>

<llo_original>
// kernel: tpu_custom_call.1
$region0: #{tpu_custom_call.1}
  #allocation0 [shape = 'u32[]', space=smem, size = 0x4, offset = 0x4, fixed_abs, tag = 'smem constant byte address 0x4 - core index']
  #allocation1 [shape = 'u32[144,128]{1,0:T(1,128)}', space=vmem, size = 0x12000, scoped, tag = 'internal scratch']
  %s0 = inlined_call_operand.hbm [shape: f32[2,1024], index: 0, kind: input, shape index: {}, may-alias: {0,2}]
  %s1 = inlined_call_operand.hbm [shape: f32[2,1024], index: 1, kind: input, shape index: {}, may-alias: {1,3}]
  %s2 = inlined_call_operand.hbm [shape: f32[2,1024], index: 2, kind: output, shape index: {0}, may-alias: {0,2}]
  %s3 = inlined_call_operand.hbm [shape: f32[2,1024], index: 3, kind: output, shape index: {1}, may-alias: {1,3}]
  %4 = xla_tuple %s2, %s3
  %s5 = sld [smem:[#allocation0]]
  $region34: #{tpu_custom_call.1} parent=0
    _
  %s7 = ssub.s32 1, %s5
  %s8 = scalar_select 0, %s7, %s5
  $region1: #{tpu_custom_call.1} parent=0
    #allocation2 [shape = 'u8[8192]{0}', space=vmem, size = 0x2000, scoped, tag = 'input window, operand 0, single buffered']
    #allocation3 [shape = 's32[1]{0}', space=sflag, size = 0x4, scoped, tag = 'scoped memory for tpu_custom_call.1']
    #allocation4 [shape = 's32[1]{0}', space=sflag, size = 0x4, scoped, tag = 'scoped memory for tpu_custom_call.1']
    #allocation5 [shape = 'u8[8192]{0}', space=vmem, size = 0x2000, scoped, tag = 'input window, operand 1, single buffered']
    #allocation6 [shape = 's32[1]{0}', space=sflag, size = 0x4, scoped, tag = 'scoped memory for tpu_custom_call.1']
    #allocation7 [shape = 'u8[8192]{0}', space=vmem, size = 0x2000, scoped, tag = 'output window, operand 0, single buffered']
    #allocation8 [shape = 'u8[8192]{0}', space=vmem, size = 0x2000, scoped, tag = 'output window, operand 1, single buffered']
    #allocation9 [shape = 's32[1]{0}', space=sflag, size = 0x4, scoped, tag = 'scoped memory for tpu_custom_call.1']
    %9 = vsyncpa [#allocation3], 0
    %10 = vsyncpa [#allocation6], 0
    %11 = vsyncpa [#allocation4], 0
    %12 = vsyncpa [#allocation9], 0
    // Predicated region
    $region2: #{tpu_custom_call.1} parent=1 // pred_check
      _
    $region3: #{tpu_custom_call.1} parent=1 // pred_check_branch
      %14 = sbr.rel (0) target = $region5
    $region4: #{tpu_custom_call.1} parent=1 // pred_region
      %s16 = ssub.s32 256, 256
      %17 = vsyncadd [#allocation3], %s16
      %s19 = sshll.u32 [#allocation2], 4
      %s20 = int_to_ptr.vmem [resolvable:$true] %s19
      %22 = dma.hbm_to_vmem [thread:$0]  %s0, 256, %s20, [#allocation3]
    $region5: #{tpu_custom_call.1} parent=1 // pred_fallthru
      _
    // Predicated region
    $region6: #{tpu_custom_call.1} parent=1 // pred_check
      _
    $region7: #{tpu_custom_call.1} parent=1 // pred_check_branch
      %24 = sbr.rel (0) target = $region9
    $region8: #{tpu_custom_call.1} parent=1 // pred_region
      %s26 = ssub.s32 256, 256
      %27 = vsyncadd [#allocation6], %s26
      %s29 = sshll.u32 [#allocation5], 4
      %s30 = int_to_ptr.vmem [resolvable:$true] %s29
      %32 = dma.hbm_to_vmem [thread:$0]  %s1, 256, %s30, [#allocation6]
    $region9: #{tpu_custom_call.1} parent=1 // pred_fallthru
      _
    // Predicated region
    $region10: #{tpu_custom_call.1} parent=1 // pred_check
      _
    $region11: #{tpu_custom_call.1} parent=1 // pred_check_branch
      %34 = sbr.rel (0) target = $region13
    $region12: #{tpu_custom_call.1} parent=1 // pred_region
      %35 = dma.done [#allocation3], 256
    $region13: #{tpu_custom_call.1} parent=1 // pred_fallthru
      _
    // Predicated region
    $region14: #{tpu_custom_call.1} parent=1 // pred_check
      _
    $region15: #{tpu_custom_call.1} parent=1 // pred_check_branch
      %37 = sbr.rel (0) target = $region17
    $region16: #{tpu_custom_call.1} parent=1 // pred_region
      %38 = dma.done [#allocation6], 256
    $region17: #{tpu_custom_call.1} parent=1 // pred_fallthru
      _
    %v39 = vld [vmem:[#allocation2] sm:$0xff]
    %v40 = vld [vmem:[#allocation2 + $0x8] sm:$0xff]
    %41 = vst [vmem:[#allocation7] sm:$0xff] %v39
    %42 = vst [vmem:[#allocation7 + $0x8] sm:$0xff] %v40
    %v43 = vld [vmem:[#allocation5] sm:$0xff]
    %v44 = vld [vmem:[#allocation5 + $0x8] sm:$0xff]
    %45 = vst [vmem:[#allocation8] sm:$0xff] %v43
    %46 = vst [vmem:[#allocation8 + $0x8] sm:$0xff] %v44
    // Predicated region
    $region18: #{tpu_custom_call.1} parent=1 // pred_check
      _
    $region19: #{tpu_custom_call.1} parent=1 // pred_check_branch
      %48 = sbr.rel (0) target = $region21
    $region20: #{tpu_custom_call.1} parent=1 // pred_region
      %s50 = ssub.s32 256, 256
      %51 = vsyncadd [#allocation4], %s50
      %s53 = sshll.u32 [#allocation7], 4
      %s54 = int_to_ptr.vmem [resolvable:$true] %s53
      %56 = dma.vmem_to_hbm [thread:$0]  %s54, 256, %s2, [#allocation4]
    $region21: #{tpu_custom_call.1} parent=1 // pred_fallthru
      _
    // Predicated region
    $region22: #{tpu_custom_call.1} parent=1 // pred_check
      _
    $region23: #{tpu_custom_call.1} parent=1 // pred_check_branch
      %58 = sbr.rel (0) target = $region25
    $region24: #{tpu_custom_call.1} parent=1 // pred_region
      %s60 = ssub.s32 256, 256
      %61 = vsyncadd [#allocation9], %s60
      %s63 = sshll.u32 [#allocation8], 4
      %s64 = int_to_ptr.vmem [resolvable:$true] %s63
      %66 = dma.vmem_to_hbm [thread:$0]  %s64, 256, %s3, [#allocation9]
    $region25: #{tpu_custom_call.1} parent=1 // pred_fallthru
      _
    // Predicated region
    $region26: #{tpu_custom_call.1} parent=1 // pred_check
      _
    $region27: #{tpu_custom_call.1} parent=1 // pred_check_branch
      %68 = sbr.rel (0) target = $region29
    $region28: #{tpu_custom_call.1} parent=1 // pred_region
      %69 = dma.done [#allocation4], 256
    $region29: #{tpu_custom_call.1} parent=1 // pred_fallthru
      _
    // Predicated region
    $region30: #{tpu_custom_call.1} parent=1 // pred_check
      _
    $region31: #{tpu_custom_call.1} parent=1 // pred_check_branch
      %71 = sbr.rel (0) target = $region33
    $region32: #{tpu_custom_call.1} parent=1 // pred_region
      %72 = dma.done [#allocation9], 256
    $region33: #{tpu_custom_call.1} parent=1 // pred_fallthru
      _
    %73 = vsyncpa [#allocation3], 1
    %74 = vsyncpa [#allocation6], 1
    %75 = vsyncpa [#allocation4], 1
    %76 = vsyncpa [#allocation9], 1

</llo_original>
